<compile_context>
chip_gen: v7x
topology: tpu7x:2x2x1
jax: 0.10.0
libtpu: 0.0.40
codegen_flags: <defaults>
</compile_context>

<pallas_src>
import functools

import jax
import jax.numpy as jnp
from jax.experimental import pallas as pl
from jax.experimental.pallas import tpu as pltpu


def _label_smoothing_kernel(t_ref, o_ref, *, num_cls, smoothing):
    # t_ref: (1, TM) int32 targets (lane axis = samples)
    # o_ref: (num_cls, TM) float32 (sublane axis = class, lane axis = sample)
    confidence = jnp.float32(1.0 - smoothing)
    off_value = jnp.float32(smoothing / (num_cls - 1))

    t = t_ref[...]  # (1, TM)
    cls_idx = jax.lax.broadcasted_iota(jnp.int32, o_ref.shape, 0)  # (num_cls, TM)
    o_ref[...] = jnp.where(cls_idx == t, confidence, off_value)


def phase_label_smoothing(targets, num_cls=7, smoothing=0.1):
    """targets: (N,) integer array -> (N, num_cls) float32 smoothed one-hot."""
    if num_cls < 2:
        raise ValueError("num_cls must be >= 2 (smoothing / (num_cls - 1))")

    targets = jnp.asarray(targets, dtype=jnp.int32).reshape(-1)
    n = targets.shape[0]

    # Lane-dense tile over samples: TM is a multiple of 128 (lane width),
    # capped at 8192 rows/tile (well under scoped-VMEM even on v7x's 64 MiB).
    tm = min(8192, max(128, ((n + 127) // 128) * 128))
    n_pad = ((n + tm - 1) // tm) * tm
    if n_pad != n:
        # pad with -1: never matches any class; padded columns sliced off below
        targets = jnp.pad(targets, (0, n_pad - n), constant_values=-1)
    targets2d = targets.reshape(1, n_pad)

    kernel = functools.partial(
        _label_smoothing_kernel, num_cls=num_cls, smoothing=float(smoothing)
    )

    out_t = pl.pallas_call(
        kernel,
        out_shape=jax.ShapeDtypeStruct((num_cls, n_pad), jnp.float32),
        grid=(n_pad // tm,),
        in_specs=[pl.BlockSpec((1, tm), lambda i: (0, i))],
        out_specs=pl.BlockSpec((num_cls, tm), lambda i: (0, i)),
        compiler_params=pltpu.CompilerParams(
            dimension_semantics=("parallel",),
        ),
    )(targets2d)

    # (num_cls, N_pad) -> (N, num_cls); transpose/slice is cheap XLA plumbing.
    return out_t.T[:n]


def _reference(targets, num_cls, smoothing):
    n = targets.shape[0]
    ref = jnp.full((n, num_cls), smoothing / (num_cls - 1), dtype=jnp.float32)
    return ref.at[jnp.arange(n), targets].set(1.0 - smoothing)


if __name__ == "__main__":
    num_cls = 7
    smoothing = 0.1
    key = jax.random.PRNGKey(0)

    # Small test matching the module's typical usage.
    n = 8
    targets = jax.random.randint(key, (n,), 0, num_cls, dtype=jnp.int32)
    out = jax.block_until_ready(phase_label_smoothing(targets, num_cls, smoothing))
    assert out.shape == (n, num_cls) and out.dtype == jnp.float32
    assert jnp.allclose(out, _reference(targets, num_cls, smoothing), atol=1e-6)

    # Non-multiple-of-128 size to exercise padding + tiled path.
    n2 = 300
    targets2 = jax.random.randint(
        jax.random.PRNGKey(1), (n2,), 0, num_cls, dtype=jnp.int32
    )
    out2 = jax.block_until_ready(phase_label_smoothing(targets2, num_cls, smoothing))
    assert out2.shape == (n2, num_cls)
    assert jnp.allclose(out2, _reference(targets2, num_cls, smoothing), atol=1e-6)

    print("KERNEL_OK")
</pallas_src>

<mosaic_0001>
module attributes {stable_mosaic.version = 11 : i64} {
  func.func @_label_smoothing_kernel(%arg0: i32, %arg1: memref<1x128xi32, #tpu.memory_space<vmem>>, %arg2: memref<7x128xf32, #tpu.memory_space<vmem>>) attributes {dimension_semantics = [#tpu.dimension_semantics<parallel>], iteration_bounds = array<i64: 1>, scalar_prefetch = 0 : i64, scratch_operands = 0 : i64, tpu.core_type = #tpu.core_type<tc>, window_params = [{transform_indices = @transform_0, window_bounds = array<i64: 1, 128>}, {transform_indices = @transform_1, window_bounds = array<i64: 7, 128>}]} {
    %c0 = arith.constant 0 : index
    %c0_0 = arith.constant 0 : index
    %0 = vector.load %arg1[%c0, %c0_0] : memref<1x128xi32, #tpu.memory_space<vmem>>, vector<1x128xi32>
    %1 = tpu.iota {dimensions = array<i32: 0>} : vector<7x128xi32>
    %2 = vector.broadcast %0 : vector<1x128xi32> to vector<7x128xi32>
    %3 = arith.cmpi eq, %1, %2 : vector<7x128xi32>
    %cst = arith.constant 0.899999976 : f32
    %cst_1 = arith.constant 0.0166666675 : f32
    %4 = vector.broadcast %cst : f32 to vector<7x128xf32>
    %5 = vector.broadcast %cst_1 : f32 to vector<7x128xf32>
    %6 = arith.select %3, %4, %5 : vector<7x128xi1>, vector<7x128xf32>
    %c0_2 = arith.constant 0 : index
    %c0_3 = arith.constant 0 : index
    %7 = vector.load %arg2[%c0_2, %c0_3] : memref<7x128xf32, #tpu.memory_space<vmem>>, vector<7x128xf32>
    tpu.vector_store %arg2[%c0_2, %c0_3], %6 {strides = array<i32>} : memref<7x128xf32, #tpu.memory_space<vmem>>, vector<7x128xf32>,
    return
  }
  func.func @transform_0(%arg0: i32) -> (i32, i32) {
    %c0_i32 = arith.constant 0 : i32
    %c0_i32_0 = arith.constant 0 : i32
    return %c0_i32, %arg0 : i32, i32
  }
  func.func @transform_1(%arg0: i32) -> (i32, i32) {
    %c0_i32 = arith.constant 0 : i32
    %c0_i32_0 = arith.constant 0 : i32
    return %c0_i32, %arg0 : i32, i32
  }
}

</mosaic_0001>

<llo_original>
// kernel: tpu_custom_call.1
$region0: #{tpu_custom_call.1}
  #allocation0 [shape = 'u32[]', space=smem, size = 0x4, offset = 0x4, fixed_abs, tag = 'smem constant byte address 0x4 - core index']
  #allocation1 [shape = 'u32[144,128]{1,0:T(1,128)}', space=vmem, size = 0x12000, scoped, tag = 'internal scratch']
  %s0 = inlined_call_operand.hbm [shape: s32[1,128], index: 0, kind: input, shape index: {}]
  %s1 = inlined_call_operand.hbm [shape: f32[7,128], index: 1, kind: output, shape index: {}]
  %s2 = sld [smem:[#allocation0]]
  $region18: #{tpu_custom_call.1} parent=0
    _
  %s4 = ssub.s32 1, %s2
  %s5 = scalar_select 0, %s4, %s2
  $region1: #{tpu_custom_call.1} parent=0
    #allocation2 [shape = 'u8[512]{0}', space=vmem, size = 0x400, scoped, tag = 'input window, operand 0, single buffered']
    #allocation3 [shape = 's32[1]{0}', space=sflag, size = 0x4, scoped, tag = 'scoped memory for tpu_custom_call.1']
    #allocation4 [shape = 's32[1]{0}', space=sflag, size = 0x4, scoped, tag = 'scoped memory for tpu_custom_call.1']
    #allocation5 [shape = 'u8[4096]{0}', space=vmem, size = 0x1000, scoped, tag = 'output window, operand 0, single buffered']
    %6 = vsyncpa [#allocation3], 0
    %7 = vsyncpa [#allocation4], 0
    // Predicated region
    $region2: #{tpu_custom_call.1} parent=1 // pred_check
      _
    $region3: #{tpu_custom_call.1} parent=1 // pred_check_branch
      %9 = sbr.rel (0) target = $region5
    $region4: #{tpu_custom_call.1} parent=1 // pred_region
      %s11 = ssub.s32 16, 16
      %12 = vsyncadd [#allocation3], %s11
      %s14 = sshll.u32 [#allocation2], 4
      %s15 = int_to_ptr.vmem [resolvable:$true] %s14
      %17 = dma.hbm_to_vmem [thread:$0]  %s0, 16, %s15, [#allocation3]
    $region5: #{tpu_custom_call.1} parent=1 // pred_fallthru
      _
    // Predicated region
    $region6: #{tpu_custom_call.1} parent=1 // pred_check
      _
    $region7: #{tpu_custom_call.1} parent=1 // pred_check_branch
      %19 = sbr.rel (0) target = $region9
    $region8: #{tpu_custom_call.1} parent=1 // pred_region
      %20 = dma.done [#allocation3], 16
    $region9: #{tpu_custom_call.1} parent=1 // pred_fallthru
      _
    %v21 = vld [vmem:[#allocation2] sm:$0x1]
    %v22 = vlaneseq
    %v23 = vshrl.u32 %v22, 7
    %v24 = vlaneseq
    %v25 = vshrl.u32 %v24, 7
    %v26 = vsub.s32 0, %v25
    %v27 = vrot.slane %v21, %v26
    %vm28 = vcmp.eq.s32.totalorder %v23, %v27
    %v29 = vsel %vm28, 0.9, 0.016666668
    %30 = vst [vmem:[#allocation5] sm:$0x7f] %v29
    // Predicated region
    $region10: #{tpu_custom_call.1} parent=1 // pred_check
      _
    $region11: #{tpu_custom_call.1} parent=1 // pred_check_branch
      %32 = sbr.rel (0) target = $region13
    $region12: #{tpu_custom_call.1} parent=1 // pred_region
      %s34 = ssub.s32 128, 128
      %35 = vsyncadd [#allocation4], %s34
      %s37 = sshll.u32 [#allocation5], 4
      %s38 = int_to_ptr.vmem [resolvable:$true] %s37
      %40 = dma.vmem_to_hbm [thread:$0]  %s38, 128, %s1, [#allocation4]
    $region13: #{tpu_custom_call.1} parent=1 // pred_fallthru
      _
    // Predicated region
    $region14: #{tpu_custom_call.1} parent=1 // pred_check
      _
    $region15: #{tpu_custom_call.1} parent=1 // pred_check_branch
      %42 = sbr.rel (0) target = $region17
    $region16: #{tpu_custom_call.1} parent=1 // pred_region
      %43 = dma.done [#allocation4], 128
    $region17: #{tpu_custom_call.1} parent=1 // pred_fallthru
      _
    %44 = vsyncpa [#allocation3], 1
    %45 = vsyncpa [#allocation4], 1

</llo_original>
